<compile_context>
chip_gen: v6e
topology: v6e:2x2x1
jax: 0.10.0
libtpu: 0.0.40
codegen_flags: <defaults>
</compile_context>

<pallas_src>
import functools

import jax
import jax.numpy as jnp
from jax.experimental import pallas as pl
from jax.experimental.pallas import tpu as pltpu


def _balance_kernel(x_ref, psum_ref, cnt_ref, *, num_experts, tile_lanes,
                    n_valid_tokens, n_chunks, need_mask):
    part = pl.program_id(0)          # megacore partition (parallel)
    step = pl.program_id(1)          # token-chunk step (arbitrary / reduction)
    n_steps = pl.num_programs(1)
    chunk = part * n_steps + step    # global chunk index

    @pl.when(step == 0)
    def _init():
        # Output blocks are resident across the step axis: init once per partition.
        psum_ref[...] = jnp.zeros_like(psum_ref)
        cnt_ref[...] = jnp.zeros_like(cnt_ref)

    def _accumulate(masked):
        # (E, L): experts on sublanes, tokens lane-dense; cast to f32 on load.
        logits = x_ref[...].astype(jnp.float32)

        if masked:
            # Ragged tail chunk: lanes >= T hold undefined data (partial edge
            # block).  Sanitize them before exp/max so no NaN/inf can leak in.
            lane = jax.lax.broadcasted_iota(jnp.int32, (1, tile_lanes), 1)
            tok = chunk * tile_lanes + lane
            valid = tok < n_valid_tokens                          # (1, L) bool
            logits = jnp.where(valid, logits, 0.0)

        # Softmax over experts (sublane axis).
        m = jnp.max(logits, axis=0, keepdims=True)                # (1, L)
        ex = jnp.exp(logits - m)                                  # (E, L)
        denom = jnp.sum(ex, axis=0, keepdims=True)                # (1, L)
        # One exact reciprocal row per tile instead of E divides per token
        # (approx EUP reciprocal rejected: would not hold 1e-5/1e-6 tolerance).
        probs = ex * (1.0 / denom)                                # (E, L)

        # argmax(probs) == argmax(logits) (softmax is monotone): reuse `m`;
        # first-occurrence tie-break matches torch.argmax.
        e_iota = jax.lax.broadcasted_iota(jnp.int32, logits.shape, 0)
        first = jnp.min(jnp.where(logits == m, e_iota, num_experts),
                        axis=0, keepdims=True)                    # (1, L)
        one_hot = (e_iota == first).astype(jnp.float32)           # (E, L)

        if masked:
            valid_f = valid.astype(jnp.float32)
            probs = probs * valid_f
            one_hot = one_hot * valid_f

        # Lane-reduce this tile and accumulate into the resident output blocks.
        psum_ref[...] += jnp.sum(probs, axis=1, keepdims=True)[None, :, :]
        cnt_ref[...] += jnp.sum(one_hot, axis=1, keepdims=True)[None, :, :]

    if need_mask:
        # Only the globally-last chunk can contain invalid lanes; keep the hot
        # path (all other chunks) completely mask-free.
        is_tail = chunk == (n_chunks - 1)

        @pl.when(is_tail)
        def _tail():
            _accumulate(True)

        @pl.when(jnp.logical_not(is_tail))
        def _body():
            _accumulate(False)
    else:
        _accumulate(False)


def load_balancing_loss(router_logits, wBAL, num_experts, *,
                        target_block_bytes=1 << 20):
    """Pallas implementation of LoadBalancingLoss.forward."""
    if isinstance(router_logits, (tuple, list)):
        router_logits = jnp.concatenate(router_logits, axis=0)

    x = jnp.asarray(router_logits).reshape(-1, num_experts)       # (T, E)
    T, E = x.shape
    xt = x.T                                                      # (E, T): tokens lane-dense

    # Token tiling: ~1 MiB (f32-equivalent) input blocks, lane-aligned.  A
    # single full-extent block when T is small; otherwise fixed chunks with the
    # ragged tail masked in-kernel (no host-side padding copy).
    max_tile_lanes = max(128, (target_block_bytes // (4 * E)) // 128 * 128)
    if T <= max_tile_lanes:
        tile_lanes = T
        n_chunks = 1
    else:
        tile_lanes = max_tile_lanes
        n_chunks = pl.cdiv(T, tile_lanes)
    need_mask = (n_chunks * tile_lanes) != T

    # Split token chunks across a leading "parallel" axis so v7x uses both
    # TensorCores; on 1-TC chips (v5e/v6e) this is just an outer loop.
    n_par = 2 if (n_chunks >= 2 and n_chunks % 2 == 0) else 1
    n_steps = n_chunks // n_par

    kernel = functools.partial(
        _balance_kernel,
        num_experts=E,
        tile_lanes=tile_lanes,
        n_valid_tokens=T,
        n_chunks=n_chunks,
        need_mask=need_mask,
    )

    psum_parts, cnt_parts = pl.pallas_call(
        kernel,
        out_shape=(
            jax.ShapeDtypeStruct((n_par, E, 1), jnp.float32),     # per-partition sum of probs
            jax.ShapeDtypeStruct((n_par, E, 1), jnp.float32),     # per-partition argmax counts
        ),
        grid_spec=pltpu.PrefetchScalarGridSpec(
            num_scalar_prefetch=0,
            grid=(n_par, n_steps),
            in_specs=[
                pl.BlockSpec((E, tile_lanes),
                             lambda p, s: (0, p * n_steps + s)),
            ],
            out_specs=(
                pl.BlockSpec((1, E, 1), lambda p, s: (p, 0, 0)),
                pl.BlockSpec((1, E, 1), lambda p, s: (p, 0, 0)),
            ),
        ),
        compiler_params=pltpu.CompilerParams(
            dimension_semantics=("parallel", "arbitrary"),
        ),
    )(xt)

    # Tiny scalar finalize in the wrapper (combines megacore partials).
    psum = jnp.sum(psum_parts[:, :, 0], axis=0)                   # (E,)
    cnt = jnp.sum(cnt_parts[:, :, 0], axis=0)                     # (E,)
    p = psum / jnp.float32(T)                                     # mean prob per expert
    f = cnt / jnp.sum(cnt)                                        # fraction of tokens per expert
    w = jnp.abs(jnp.asarray(wBAL, dtype=jnp.float32))
    return w * jnp.float32(E) * jnp.sum(p * f)


def _reference(router_logits, wBAL, num_experts):
    x = jnp.asarray(router_logits).reshape(-1, num_experts).astype(jnp.float32)
    probs = jax.nn.softmax(x, axis=-1)
    gate = jnp.argmax(probs, axis=-1)
    counts = jnp.sum(jax.nn.one_hot(gate, num_experts) > 0, axis=0).astype(jnp.float32)
    p = probs.mean(0)
    f = counts / counts.sum()
    return jnp.abs(jnp.float32(wBAL)) * num_experts * jnp.sum(p * f)


if __name__ == "__main__":
    # config: wBAL and num_experts as in __init__
    wBAL = 0.01
    num_experts = 8

    # router_logits: (batch=2, seq=16, num_experts=8) -> flattened to (32, 8)
    key = jax.random.PRNGKey(0)
    router_logits = jax.random.normal(key, (2, 16, num_experts), dtype=jnp.float32)

    loss = load_balancing_loss(router_logits, wBAL, num_experts)
    loss = jax.block_until_ready(loss)
    ref = _reference(router_logits, wBAL, num_experts)
    assert jnp.allclose(loss, ref, rtol=1e-5, atol=1e-6), (loss, ref)

    # Secondary check: exercise the multi-chunk + megacore-split + ragged-tail
    # (in-kernel masked) path at a tiny tile size (T=1000, 128-token chunks).
    key2 = jax.random.PRNGKey(1)
    logits2 = jax.random.normal(key2, (1000, num_experts), dtype=jnp.float32)
    loss2 = jax.block_until_ready(
        load_balancing_loss(logits2, wBAL, num_experts, target_block_bytes=4096))
    ref2 = _reference(logits2, wBAL, num_experts)
    assert jnp.allclose(loss2, ref2, rtol=1e-5, atol=1e-6), (loss2, ref2)

    print("KERNEL_OK")
</pallas_src>

<mosaic_0001>
module attributes {stable_mosaic.version = 11 : i64} {
  func.func @_balance_kernel(%arg0: i32, %arg1: i32, %arg2: memref<8x32xf32, #tpu.memory_space<vmem>>, %arg3: memref<1x8x1xf32, #tpu.memory_space<vmem>>, %arg4: memref<1x8x1xf32, #tpu.memory_space<vmem>>) attributes {dimension_semantics = [#tpu.dimension_semantics<parallel>, #tpu.dimension_semantics<arbitrary>], iteration_bounds = array<i64: 1, 1>, scalar_prefetch = 0 : i64, scratch_operands = 0 : i64, tpu.core_type = #tpu.core_type<tc>, window_params = [{transform_indices = @transform_0, window_bounds = array<i64: 8, 32>}, {transform_indices = @transform_1, window_bounds = array<i64: 1, 8, 1>}, {transform_indices = @transform_2, window_bounds = array<i64: 1, 8, 1>}]} {
    %c0_i32 = arith.constant 0 : i32
    %0 = arith.cmpi eq, %arg1, %c0_i32 : i32
    %1 = arith.extui %0 : i1 to i32
    %c0_i32_0 = arith.constant 0 : i32
    %2 = arith.cmpi ne, %1, %c0_i32_0 : i32
    scf.if %2 {
      %cst_19 = arith.constant 0.000000e+00 : f32
      %38 = vector.broadcast %cst_19 : f32 to vector<1x8x1xf32>
      %c0_20 = arith.constant 0 : index
      %c0_21 = arith.constant 0 : index
      %c0_22 = arith.constant 0 : index
      %39 = vector.load %arg3[%c0_20, %c0_21, %c0_22] : memref<1x8x1xf32, #tpu.memory_space<vmem>>, vector<1x8x1xf32>
      tpu.vector_store %arg3[%c0_20, %c0_21, %c0_22], %38 {strides = array<i32>} : memref<1x8x1xf32, #tpu.memory_space<vmem>>, vector<1x8x1xf32>,
      %cst_23 = arith.constant 0.000000e+00 : f32
      %40 = vector.broadcast %cst_23 : f32 to vector<1x8x1xf32>
      %c0_24 = arith.constant 0 : index
      %c0_25 = arith.constant 0 : index
      %c0_26 = arith.constant 0 : index
      %41 = vector.load %arg4[%c0_24, %c0_25, %c0_26] : memref<1x8x1xf32, #tpu.memory_space<vmem>>, vector<1x8x1xf32>
      tpu.vector_store %arg4[%c0_24, %c0_25, %c0_26], %40 {strides = array<i32>} : memref<1x8x1xf32, #tpu.memory_space<vmem>>, vector<1x8x1xf32>,
    } else {
    }
    %c0 = arith.constant 0 : index
    %c0_1 = arith.constant 0 : index
    %3 = vector.load %arg2[%c0, %c0_1] : memref<8x32xf32, #tpu.memory_space<vmem>>, vector<8x32xf32>
    %cst = arith.constant dense<0xFF800000> : vector<32xf32>
    %4 = vector.multi_reduction <maximumf>, %3, %cst [0] : vector<8x32xf32> to vector<32xf32>
    %5 = vector.shape_cast %4 : vector<32xf32> to vector<1x32xf32>
    %6 = vector.broadcast %5 : vector<1x32xf32> to vector<8x32xf32>
    %7 = arith.subf %3, %6 : vector<8x32xf32>
    %8 = math.exp %7 : vector<8x32xf32>
    %cst_2 = arith.constant dense<0.000000e+00> : vector<32xf32>
    %9 = vector.multi_reduction <add>, %8, %cst_2 [0] : vector<8x32xf32> to vector<32xf32>
    %10 = vector.shape_cast %9 : vector<32xf32> to vector<1x32xf32>
    %cst_3 = arith.constant 1.000000e+00 : f32
    %11 = vector.broadcast %cst_3 : f32 to vector<1x32xf32>
    %12 = arith.divf %11, %10 : vector<1x32xf32>
    %13 = vector.broadcast %12 : vector<1x32xf32> to vector<8x32xf32>
    %14 = arith.mulf %8, %13 : vector<8x32xf32>
    %15 = tpu.iota {dimensions = array<i32: 0>} : vector<8x32xi32>
    %16 = vector.broadcast %5 : vector<1x32xf32> to vector<8x32xf32>
    %17 = arith.cmpf oeq, %3, %16 : vector<8x32xf32>
    %c8_i32 = arith.constant 8 : i32
    %18 = vector.broadcast %c8_i32 : i32 to vector<8x32xi32>
    %19 = arith.select %17, %15, %18 : vector<8x32xi1>, vector<8x32xi32>
    %cst_4 = arith.constant dense<2147483647> : vector<32xi32>
    %20 = vector.multi_reduction <minsi>, %19, %cst_4 [0] : vector<8x32xi32> to vector<32xi32>
    %21 = vector.shape_cast %20 : vector<32xi32> to vector<1x32xi32>
    %22 = vector.broadcast %21 : vector<1x32xi32> to vector<8x32xi32>
    %23 = arith.cmpi eq, %15, %22 : vector<8x32xi32>
    %24 = arith.extui %23 : vector<8x32xi1> to vector<8x32xi32>
    %25 = arith.sitofp %24 : vector<8x32xi32> to vector<8x32xf32>
    %c0_5 = arith.constant 0 : index
    %c0_6 = arith.constant 0 : index
    %c0_7 = arith.constant 0 : index
    %26 = vector.load %arg3[%c0_5, %c0_6, %c0_7] : memref<1x8x1xf32, #tpu.memory_space<vmem>>, vector<1x8x1xf32>
    %cst_8 = arith.constant dense<0.000000e+00> : vector<8xf32>
    %27 = vector.multi_reduction <add>, %14, %cst_8 [1] : vector<8x32xf32> to vector<8xf32>
    %28 = vector.shape_cast %27 : vector<8xf32> to vector<8x1xf32>
    %29 = vector.shape_cast %28 : vector<8x1xf32> to vector<1x8x1xf32>
    %30 = arith.addf %26, %29 : vector<1x8x1xf32>
    %c0_9 = arith.constant 0 : index
    %c0_10 = arith.constant 0 : index
    %c0_11 = arith.constant 0 : index
    %31 = vector.load %arg3[%c0_9, %c0_10, %c0_11] : memref<1x8x1xf32, #tpu.memory_space<vmem>>, vector<1x8x1xf32>
    tpu.vector_store %arg3[%c0_9, %c0_10, %c0_11], %30 {strides = array<i32>} : memref<1x8x1xf32, #tpu.memory_space<vmem>>, vector<1x8x1xf32>,
    %c0_12 = arith.constant 0 : index
    %c0_13 = arith.constant 0 : index
    %c0_14 = arith.constant 0 : index
    %32 = vector.load %arg4[%c0_12, %c0_13, %c0_14] : memref<1x8x1xf32, #tpu.memory_space<vmem>>, vector<1x8x1xf32>
    %cst_15 = arith.constant dense<0.000000e+00> : vector<8xf32>
    %33 = vector.multi_reduction <add>, %25, %cst_15 [1] : vector<8x32xf32> to vector<8xf32>
    %34 = vector.shape_cast %33 : vector<8xf32> to vector<8x1xf32>
    %35 = vector.shape_cast %34 : vector<8x1xf32> to vector<1x8x1xf32>
    %36 = arith.addf %32, %35 : vector<1x8x1xf32>
    %c0_16 = arith.constant 0 : index
    %c0_17 = arith.constant 0 : index
    %c0_18 = arith.constant 0 : index
    %37 = vector.load %arg4[%c0_16, %c0_17, %c0_18] : memref<1x8x1xf32, #tpu.memory_space<vmem>>, vector<1x8x1xf32>
    tpu.vector_store %arg4[%c0_16, %c0_17, %c0_18], %36 {strides = array<i32>} : memref<1x8x1xf32, #tpu.memory_space<vmem>>, vector<1x8x1xf32>,
    return
  }
  func.func @transform_0(%arg0: i32, %arg1: i32) -> (i32, i32) {
    %c1_i32 = arith.constant 1 : i32
    %0 = arith.muli %arg0, %c1_i32 : i32
    %1 = arith.addi %0, %arg1 : i32
    %c0_i32 = arith.constant 0 : i32
    %c0_i32_0 = arith.constant 0 : i32
    return %c0_i32, %1 : i32, i32
  }
  func.func @transform_1(%arg0: i32, %arg1: i32) -> (i32, i32, i32) {
    %c0_i32 = arith.constant 0 : i32
    %c0_i32_0 = arith.constant 0 : i32
    %c0_i32_1 = arith.constant 0 : i32
    return %arg0, %c0_i32, %c0_i32_0 : i32, i32, i32
  }
  func.func @transform_2(%arg0: i32, %arg1: i32) -> (i32, i32, i32) {
    %c0_i32 = arith.constant 0 : i32
    %c0_i32_0 = arith.constant 0 : i32
    %c0_i32_1 = arith.constant 0 : i32
    return %arg0, %c0_i32, %c0_i32_0 : i32, i32, i32
  }
}

</mosaic_0001>

<llo_original>
// kernel: tpu_custom_call.1
$region0: #{tpu_custom_call.1}
  #allocation0 [shape = 'u32[]', space=smem, size = 0x4, offset = 0x4, fixed_abs, tag = 'smem constant byte address 0x4 - core index']
  #allocation1 [shape = 'u32[144,128]{1,0:T(1,128)}', space=vmem, size = 0x12000, scoped, tag = 'internal scratch']
  %s0 = inlined_call_operand.hbm [shape: f32[8,32], index: 0, kind: input, shape index: {}]
  %s1 = inlined_call_operand.vmem [shape: f32[1,8,1], index: 1, kind: output, shape index: {0}]
  %s2 = inlined_call_operand.vmem [shape: f32[1,8,1], index: 2, kind: output, shape index: {1}]
  %3 = xla_tuple %s1, %s2
  %s4 = sld [smem:[#allocation0]]
  $region30: #{tpu_custom_call.1} parent=0
    _
  %s6 = ssub.s32 1, %s4
  %s7 = scalar_select 0, %s6, %s4
  $region1: #{tpu_custom_call.1} parent=0
    #allocation2 [shape = 'u8[4096]{0}', space=vmem, size = 0x1000, scoped, tag = 'input window, operand 0, single buffered']
    #allocation3 [shape = 's32[1]{0}', space=sflag, size = 0x4, scoped, tag = 'scoped memory for tpu_custom_call.1']
    %8 = vsyncpa [#allocation3], 0
    // Predicated region
    $region2: #{tpu_custom_call.1} parent=1 // pred_check
      _
    $region3: #{tpu_custom_call.1} parent=1 // pred_check_branch
      %10 = sbr.rel (0) target = $region5
    $region4: #{tpu_custom_call.1} parent=1 // pred_region
      %s11 = sadd.s32 0, 0
      %s13 = ssub.s32 128, 128
      %14 = vsyncadd [#allocation3], %s13
      %s15 = smul.addr %s11, 128
      %s16 = scalar_lea.hbm %s0, %s15
      %s18 = sshll.u32 [#allocation2], 4
      %s19 = int_to_ptr.vmem [resolvable:$true] %s18
      %21 = dma.hbm_to_vmem [thread:$0]  %s16, 128, %s19, [#allocation3]
    $region5: #{tpu_custom_call.1} parent=1 // pred_fallthru
      _
    // Predicated region
    $region6: #{tpu_custom_call.1} parent=1 // pred_check
      _
    $region7: #{tpu_custom_call.1} parent=1 // pred_check_branch
      %23 = sbr.rel (0) target = $region9
    $region8: #{tpu_custom_call.1} parent=1 // pred_region
      %24 = dma.done [#allocation3], 128
    $region9: #{tpu_custom_call.1} parent=1 // pred_fallthru
      _
    %s25 = sadd.s32 0, 0
    %p26 = scmp.eq.s32.totalorder 0, 0
    // Predicated region
    $region10: #{tpu_custom_call.1} parent=1 // pred_check
      %p27 = pneg %p26
    $region11: #{tpu_custom_call.1} parent=1 // pred_check_branch
      %29 = sbr.rel (%p27) target = $region13
    $region12: #{tpu_custom_call.1} parent=1 // pred_region
      %vm30 = vcmask 7168
      %31 = vst.msk [vmem:[%s1] sm:$0xff] %vm30, 0.0
      %32 = vst.msk [vmem:[%s2] sm:$0xff] %vm30, 0.0
    $region13: #{tpu_custom_call.1} parent=1 // pred_fallthru
      _
    %v33 = vld [vmem:[#allocation2] sm:$0xff]
    %vm34 = vcmask 261120
    %v35 = vsel %vm34, %v33, -inf
    %v36 = vrot.slane %v35, 4
    %v37 = vmax.f32 %v35, %v36
    %v38 = vrot.slane %v37, 2
    %v39 = vmax.f32 %v37, %v38
    %v40 = vrot.slane %v39, 1
    %v41 = vmax.f32 %v39, %v40
    %v42 = vsub.f32 %v33, %v41
    %v43 = vmul.f32 %v42, 1.442695
    %v44 = vpow.pop %v43
    %v45 = vsel %vm34, %v44, 0.0
    %v46 = vrot.slane %v45, 4
    %v47 = vadd.f32 %v45, %v46
    %v48 = vrot.slane %v47, 2
    %v49 = vadd.f32 %v47, %v48
    %v50 = vrot.slane %v49, 1
    %v51 = vadd.f32 %v49, %v50
    %v52 = vrcp.pop %v51
    %v53 = vmul.f32 1.0, %v52
    %v54 = vmul.f32 %v44, %v53
    %v55 = vlaneseq
    %v56 = vshrl.u32 %v55, 7
    %vm57 = vcmp.eq.f32.partialorder %v33, %v41
    %v58 = vsel %vm57, %v56, 8
    %v59 = vsel %vm34, %v58, 2147483647
    %v60 = vrot.slane %v59, 4
    %vm61 = vcmp.lt.s32.totalorder %v59, %v60
    %v62 = vsel %vm61, %v59, %v60
    %v63 = vrot.slane %v62, 2
    %vm64 = vcmp.lt.s32.totalorder %v62, %v63
    %v65 = vsel %vm64, %v62, %v63
    %v66 = vrot.slane %v65, 1
    %vm67 = vcmp.lt.s32.totalorder %v65, %v66
    %v68 = vsel %vm67, %v65, %v66
    %vm69 = vcmp.eq.s32.totalorder %v56, %v68
    %v70 = vsel %vm69, 1, 0
    %v71 = vcvt.s32.f32 %v70
    %v72 = vld [vmem:[%s1] sm:$0xff]
    %v73 = vsel %vm34, %v54, 0.0
    %74 = vadd.xlane.f32.xlu0 %v73
    %v75 = vpop.xlane.xlu0 %74
    %v76 = vadd.f32 %v72, %v75
    %vm77 = vcmask 7168
    %78 = vst.msk [vmem:[%s1] sm:$0xff] %vm77, %v76
    %v79 = vld [vmem:[%s2] sm:$0xff]
    %v80 = vsel %vm34, %v71, 0.0
    %81 = vadd.xlane.f32.xlu0 %v80
    %v82 = vpop.xlane.xlu0 %81
    %v83 = vadd.f32 %v79, %v82
    %84 = vst.msk [vmem:[%s2] sm:$0xff] %vm77, %v83
    // Predicated region
    $region14: #{tpu_custom_call.1} parent=1 // pred_check
      _
    $region15: #{tpu_custom_call.1} parent=1 // pred_check_branch
      %86 = sbr.rel (0) target = $region17
    $region16: #{tpu_custom_call.1} parent=1 // pred_region
      _
    $region17: #{tpu_custom_call.1} parent=1 // pred_fallthru
      _
    // Predicated region
    $region18: #{tpu_custom_call.1} parent=1 // pred_check
      _
    $region19: #{tpu_custom_call.1} parent=1 // pred_check_branch
      %88 = sbr.rel (0) target = $region21
    $region20: #{tpu_custom_call.1} parent=1 // pred_region
      _
    $region21: #{tpu_custom_call.1} parent=1 // pred_fallthru
      _
    // Predicated region
    $region22: #{tpu_custom_call.1} parent=1 // pred_check
      _
    $region23: #{tpu_custom_call.1} parent=1 // pred_check_branch
      %90 = sbr.rel (0) target = $region25
    $region24: #{tpu_custom_call.1} parent=1 // pred_region
      _
    $region25: #{tpu_custom_call.1} parent=1 // pred_fallthru
      _
    // Predicated region
    $region26: #{tpu_custom_call.1} parent=1 // pred_check
      _
    $region27: #{tpu_custom_call.1} parent=1 // pred_check_branch
      %92 = sbr.rel (0) target = $region29
    $region28: #{tpu_custom_call.1} parent=1 // pred_region
      _
    $region29: #{tpu_custom_call.1} parent=1 // pred_fallthru
      _
    %93 = vsyncpa [#allocation3], 1

</llo_original>
